<compile_context>
chip_gen: v7x
topology: tpu7x:2x2x1
jax: 0.10.0
libtpu: 0.0.40
codegen_flags: <defaults>
</compile_context>

<pallas_src>
import numpy as np

import jax
import jax.numpy as jnp
from jax.experimental import pallas as pl
from jax.experimental.pallas import tpu as pltpu

MASK_VALUE = -1000.0  # module default mask_value


def _round_up(x, m):
    return ((x + m - 1) // m) * m


# ----------------------------------------------------------------------------
# Kernel: out[i, j] = sum_k x[i, k] @ wt[k, j] + b[j]
# The f32 output block is resident across the k axis and acts as the accumulator.
# ----------------------------------------------------------------------------
def _linear_bias_kernel(x_ref, wt_ref, b_ref, o_ref):
    k = pl.program_id(2)
    acc = jnp.dot(x_ref[...], wt_ref[...], preferred_element_type=jnp.float32)

    @pl.when(k == 0)
    def _init():
        o_ref[...] = acc + b_ref[...]          # [tm, tn] + [1, tn]

    @pl.when(k > 0)
    def _accumulate():
        o_ref[...] += acc


# ----------------------------------------------------------------------------
# One-time parameter preparation (the increment()-time analogue).
# ----------------------------------------------------------------------------
def prepare_incremental_classifier(
    weight, bias, active_units=None, masking=True, mask_value=MASK_VALUE,
    *, tm=256, tn=512, tk=2048,
):
    """weight: [C, F] (nn.Linear layout), bias: [C], active_units: [C] int/bool."""
    C, F = weight.shape
    assert bias.shape == (C,)

    if masking:
        assert active_units is not None, "masking=True requires active_units"
        au = np.asarray(jax.device_get(active_units)).astype(bool)
        assert au.shape == (C,)
        active_cols = np.nonzero(au)[0]
        n_active = int(active_cols.size)
    else:
        au = None
        active_cols = np.arange(C)
        n_active = C

    params = {
        "masking": bool(masking),
        "mask_value": float(mask_value),
        "C": int(C),
        "F": int(F),
        "n_active": n_active,
        "tm_pref": int(tm),
    }
    if n_active == 0:
        # Nothing active yet: forward() returns all-mask output, no kernel needed.
        return params

    # ---- class / feature tile sizes (fixed at prep time) ----------------------
    ca128 = _round_up(n_active, 128)
    tn = min(int(tn), ca128)
    if ca128 >= 256:
        # keep >= 2 class tiles so v7x's two TensorCores can both be used
        tn = min(tn, _round_up((n_active + 1) // 2, 128))
    cap = _round_up(n_active, tn)

    fp128 = _round_up(F, 128)
    tk = fp128 if fp128 <= int(tk) else 1024   # collapse the k axis when F fits
    fp = _round_up(F, tk)

    # ---- weight: gather active classes, transpose to [F, C_act], bf16, pad ----
    w = jnp.asarray(weight, jnp.float32)
    b = jnp.asarray(bias, jnp.float32)
    if masking:
        idx = jnp.asarray(active_cols, jnp.int32)
        w = jnp.take(w, idx, axis=0)            # [n_active, F]
        b = jnp.take(b, idx, axis=0)            # [n_active]
    wt = jnp.zeros((fp, cap), jnp.bfloat16).at[:F, :n_active].set(
        w.astype(jnp.bfloat16).T
    )
    bp = jnp.zeros((1, cap), jnp.float32).at[0, :n_active].set(b)

    params.update(wt=wt, bias=bp, tn=int(tn), tk=int(tk), Cap=int(cap), Fp=int(fp))

    if masking:
        # static map: output class c -> column in the compacted logits
        col_map = np.zeros((C,), np.int32)
        col_map[active_cols] = np.arange(n_active, dtype=np.int32)
        params["col_map"] = jnp.asarray(col_map)
        params["active_mask"] = jnp.asarray(au)
    return params


# ----------------------------------------------------------------------------
# Forward
# ----------------------------------------------------------------------------
def incremental_classifier_forward(params, x):
    """x: [B, F] -> [B, C] float32, same semantics as the PyTorch module."""
    B, F = x.shape
    assert F == params["F"], (F, params["F"])
    C = params["C"]
    mask_value = params["mask_value"]

    if params["n_active"] == 0:                  # masking with nothing active yet
        return jnp.full((B, C), mask_value, jnp.float32)

    tn, tk, cap, fp = params["tn"], params["tk"], params["Cap"], params["Fp"]
    tm = min(params["tm_pref"], _round_up(B, 16))   # bf16 packs 16 sublanes
    bp_ = _round_up(B, tm)

    xp = x.astype(jnp.bfloat16)
    if (bp_, fp) != (B, F):
        xp = jnp.zeros((bp_, fp), jnp.bfloat16).at[:B, :F].set(xp)

    grid = (bp_ // tm, cap // tn, fp // tk)
    out_c = pl.pallas_call(
        _linear_bias_kernel,
        out_shape=jax.ShapeDtypeStruct((bp_, cap), jnp.float32),
        grid_spec=pltpu.PrefetchScalarGridSpec(
            num_scalar_prefetch=0,
            grid=grid,
            in_specs=[
                pl.BlockSpec((tm, tk), lambda i, j, k: (i, k)),   # x
                pl.BlockSpec((tk, tn), lambda i, j, k: (k, j)),   # W^T (active classes)
                pl.BlockSpec((1, tn), lambda i, j, k: (0, j)),    # bias
            ],
            out_specs=pl.BlockSpec((tm, tn), lambda i, j, k: (i, j)),
        ),
        compiler_params=pltpu.CompilerParams(
            dimension_semantics=("parallel", "parallel", "arbitrary")
        ),
    )(xp, params["wt"], params["bias"])

    out_c = out_c[:B]
    if params["masking"]:
        # expand compacted logits back to [B, C]; inactive classes -> mask_value
        logits = jnp.take(out_c, params["col_map"], axis=1)
        return jnp.where(params["active_mask"][None, :], logits, mask_value)
    return out_c[:, :C]


# ----------------------------------------------------------------------------
# Pure-JAX reference (same bf16 operand precision as the kernel, f32 accumulate)
# ----------------------------------------------------------------------------
def _reference(x, weight, bias, active_units=None, masking=True, mask_value=MASK_VALUE):
    xw = x.astype(jnp.bfloat16).astype(jnp.float32)
    ww = jnp.asarray(weight, jnp.float32).astype(jnp.bfloat16).astype(jnp.float32)
    out = xw @ ww.T + jnp.asarray(bias, jnp.float32)[None, :]
    if masking:
        out = jnp.where(jnp.asarray(active_units).astype(bool)[None, :], out, mask_value)
    return out


def _check(name, out, ref):
    assert out.shape == ref.shape, f"{name}: shape {out.shape} vs {ref.shape}"
    assert jnp.allclose(out, ref, atol=1e-3, rtol=1e-3), f"{name}: mismatch vs reference"


if __name__ == "__main__":
    key = jax.random.PRNGKey(0)
    k1, k2, k3, k4, k5, k6, k7, k8, k9 = jax.random.split(key, 9)

    # --- Case 1: module defaults (in_features=32, initial_out_features=2), batch=8.
    B, F, C = 8, 32, 2
    x = jax.random.normal(k1, (B, F), dtype=jnp.float32)
    bound = 1.0 / jnp.sqrt(F)
    weight = jax.random.uniform(k2, (C, F), minval=-bound, maxval=bound)
    bias = jax.random.uniform(k3, (C,), minval=-bound, maxval=bound)
    active = jnp.array([1, 0], dtype=jnp.int8)          # one increment() activated class 0

    p1 = prepare_incremental_classifier(weight, bias, active, masking=True)
    out1 = jax.block_until_ready(incremental_classifier_forward(p1, x))
    _check("case1", out1, _reference(x, weight, bias, active, masking=True))

    # --- Case 2: grown classifier; 50/300 active (contiguous prefix), collapsed k.
    B2, F2, C2 = 64, 1024, 300
    x2 = jax.random.normal(k4, (B2, F2), dtype=jnp.float32)
    bound2 = 1.0 / jnp.sqrt(F2)
    weight2 = jax.random.uniform(k5, (C2, F2), minval=-bound2, maxval=bound2)
    bias2 = jax.random.uniform(k6, (C2,), minval=-bound2, maxval=bound2)
    active2 = jnp.zeros((C2,), dtype=jnp.int8).at[:50].set(1)

    p2 = prepare_incremental_classifier(weight2, bias2, active2, masking=True)
    out2 = jax.block_until_ready(incremental_classifier_forward(p2, x2))
    _check("case2", out2, _reference(x2, weight2, bias2, active2, masking=True))

    # --- Case 3: masking disabled (full class range, >=2 class tiles).
    p3 = prepare_incremental_classifier(weight2, bias2, masking=False)
    out3 = jax.block_until_ready(incremental_classifier_forward(p3, x2))
    _check("case3", out3, _reference(x2, weight2, bias2, masking=False))

    # --- Case 4: large F (> 2048) -> multi-step k accumulation into the output
    #     block, plus a non-contiguous active-unit pattern (compaction + gather).
    B4, F4, C4 = 16, 3000, 10
    x4 = jax.random.normal(k7, (B4, F4), dtype=jnp.float32)
    bound4 = 1.0 / jnp.sqrt(F4)
    weight4 = jax.random.uniform(k8, (C4, F4), minval=-bound4, maxval=bound4)
    bias4 = jax.random.uniform(k9, (C4,), minval=-bound4, maxval=bound4)
    active4 = jnp.zeros((C4,), dtype=jnp.int8).at[jnp.array([0, 2, 5, 7, 9])].set(1)

    p4 = prepare_incremental_classifier(weight4, bias4, active4, masking=True)
    out4 = jax.block_until_ready(incremental_classifier_forward(p4, x4))
    _check("case4", out4, _reference(x4, weight4, bias4, active4, masking=True))

    print("KERNEL_OK")
</pallas_src>

<mosaic_0001>
module attributes {stable_mosaic.version = 11 : i64} {
  func.func @_linear_bias_kernel(%arg0: i32, %arg1: i32, %arg2: i32, %arg3: memref<16x128xbf16, #tpu.memory_space<vmem>>, %arg4: memref<128x128xbf16, #tpu.memory_space<vmem>>, %arg5: memref<1x128xf32, #tpu.memory_space<vmem>>, %arg6: memref<16x128xf32, #tpu.memory_space<vmem>>) attributes {dimension_semantics = [#tpu.dimension_semantics<parallel>, #tpu.dimension_semantics<parallel>, #tpu.dimension_semantics<arbitrary>], iteration_bounds = array<i64: 1, 1, 1>, scalar_prefetch = 0 : i64, scratch_operands = 0 : i64, tpu.core_type = #tpu.core_type<tc>, window_params = [{transform_indices = @transform_0, window_bounds = array<i64: 16, 128>}, {transform_indices = @transform_1, window_bounds = array<i64: 128, 128>}, {transform_indices = @transform_2, window_bounds = array<i64: 1, 128>}, {transform_indices = @transform_3, window_bounds = array<i64: 16, 128>}]} {
    %c0 = arith.constant 0 : index
    %c0_0 = arith.constant 0 : index
    %0 = vector.load %arg3[%c0, %c0_0] : memref<16x128xbf16, #tpu.memory_space<vmem>>, vector<16x128xbf16>
    %c0_1 = arith.constant 0 : index
    %c0_2 = arith.constant 0 : index
    %1 = vector.load %arg4[%c0_1, %c0_2] : memref<128x128xbf16, #tpu.memory_space<vmem>>, vector<128x128xbf16>
    %cst = arith.constant dense<0.000000e+00> : vector<16x128xf32>
    %2 = tpu.matmul %0, %1, %cst {dimension_numbers = #tpu.dot_dimension_numbers<[1], [0], [0], [1], [0, 0, 1, 1], [], []>} : vector<16x128xbf16>, vector<128x128xbf16>, vector<16x128xf32> -> vector<16x128xf32>
    %c0_i32 = arith.constant 0 : i32
    %3 = arith.cmpi eq, %arg2, %c0_i32 : i32
    %4 = arith.extui %3 : i1 to i32
    %c0_i32_3 = arith.constant 0 : i32
    %5 = arith.cmpi ne, %4, %c0_i32_3 : i32
    scf.if %5 {
      %c0_6 = arith.constant 0 : index
      %c0_7 = arith.constant 0 : index
      %9 = vector.load %arg5[%c0_6, %c0_7] : memref<1x128xf32, #tpu.memory_space<vmem>>, vector<1x128xf32>
      %10 = vector.broadcast %9 : vector<1x128xf32> to vector<16x128xf32>
      %11 = arith.addf %2, %10 : vector<16x128xf32>
      %c0_8 = arith.constant 0 : index
      %c0_9 = arith.constant 0 : index
      %12 = vector.load %arg6[%c0_8, %c0_9] : memref<16x128xf32, #tpu.memory_space<vmem>>, vector<16x128xf32>
      tpu.vector_store %arg6[%c0_8, %c0_9], %11 {strides = array<i32>} : memref<16x128xf32, #tpu.memory_space<vmem>>, vector<16x128xf32>,
    } else {
    }
    %c0_i32_4 = arith.constant 0 : i32
    %6 = arith.cmpi sgt, %arg2, %c0_i32_4 : i32
    %7 = arith.extui %6 : i1 to i32
    %c0_i32_5 = arith.constant 0 : i32
    %8 = arith.cmpi ne, %7, %c0_i32_5 : i32
    scf.if %8 {
      %c0_6 = arith.constant 0 : index
      %c0_7 = arith.constant 0 : index
      %9 = vector.load %arg6[%c0_6, %c0_7] : memref<16x128xf32, #tpu.memory_space<vmem>>, vector<16x128xf32>
      %10 = arith.addf %9, %2 : vector<16x128xf32>
      %c0_8 = arith.constant 0 : index
      %c0_9 = arith.constant 0 : index
      %11 = vector.load %arg6[%c0_8, %c0_9] : memref<16x128xf32, #tpu.memory_space<vmem>>, vector<16x128xf32>
      tpu.vector_store %arg6[%c0_8, %c0_9], %10 {strides = array<i32>} : memref<16x128xf32, #tpu.memory_space<vmem>>, vector<16x128xf32>,
    } else {
    }
    return
  }
  func.func @transform_0(%arg0: i32, %arg1: i32, %arg2: i32) -> (i32, i32) {
    %c0_i32 = arith.constant 0 : i32
    return %arg0, %arg2 : i32, i32
  }
  func.func @transform_1(%arg0: i32, %arg1: i32, %arg2: i32) -> (i32, i32) {
    %c0_i32 = arith.constant 0 : i32
    return %arg2, %arg1 : i32, i32
  }
  func.func @transform_2(%arg0: i32, %arg1: i32, %arg2: i32) -> (i32, i32) {
    %c0_i32 = arith.constant 0 : i32
    %c0_i32_0 = arith.constant 0 : i32
    return %c0_i32, %arg1 : i32, i32
  }
  func.func @transform_3(%arg0: i32, %arg1: i32, %arg2: i32) -> (i32, i32) {
    %c0_i32 = arith.constant 0 : i32
    return %arg0, %arg1 : i32, i32
  }
}

</mosaic_0001>

<llo_original>
// kernel: tpu_custom_call.1
$region0: #{tpu_custom_call.1}
  #allocation0 [shape = 'u32[]', space=smem, size = 0x4, offset = 0x4, fixed_abs, tag = 'smem constant byte address 0x4 - core index']
  #allocation1 [shape = 'u32[144,128]{1,0:T(1,128)}', space=vmem, size = 0x12000, scoped, tag = 'internal scratch']
  %s0 = inlined_call_operand.hbm [shape: bf16[16,128], index: 0, kind: input, shape index: {}]
  %s1 = inlined_call_operand.hbm [shape: bf16[128,128], index: 1, kind: input, shape index: {}]
  %s2 = inlined_call_operand.vmem [shape: f32[1,128], index: 2, kind: input, shape index: {}]
  %s3 = inlined_call_operand.hbm [shape: f32[16,128], index: 3, kind: output, shape index: {}]
  %s4 = sld [smem:[#allocation0]]
  $region38: #{tpu_custom_call.1} parent=0
    _
  %s6 = ssub.s32 1, %s4
  %s7 = scalar_select 0, %s6, %s4
  $region1: #{tpu_custom_call.1} parent=0
    #allocation2 [shape = 'u8[4096]{0}', space=vmem, size = 0x1000, scoped, tag = 'input window, operand 0, single buffered']
    #allocation3 [shape = 's32[1]{0}', space=sflag, size = 0x4, scoped, tag = 'scoped memory for tpu_custom_call.1']
    #allocation4 [shape = 's32[1]{0}', space=sflag, size = 0x4, scoped, tag = 'scoped memory for tpu_custom_call.1']
    #allocation5 [shape = 'u8[32768]{0}', space=vmem, size = 0x8000, scoped, tag = 'input window, operand 1, single buffered']
    #allocation6 [shape = 's32[1]{0}', space=sflag, size = 0x4, scoped, tag = 'scoped memory for tpu_custom_call.1']
    #allocation7 [shape = 'u8[8192]{0}', space=vmem, size = 0x2000, scoped, tag = 'output window, operand 0, single buffered']
    %8 = vsyncpa [#allocation3], 0
    %9 = vsyncpa [#allocation6], 0
    %10 = vsyncpa [#allocation4], 0
    // Predicated region
    $region2: #{tpu_custom_call.1} parent=1 // pred_check
      _
    $region3: #{tpu_custom_call.1} parent=1 // pred_check_branch
      %12 = sbr.rel (0) target = $region5
    $region4: #{tpu_custom_call.1} parent=1 // pred_region
      %s14 = ssub.s32 128, 128
      %15 = vsyncadd [#allocation3], %s14
      %s16 = sshll.u32 [#allocation2], 4
      %s17 = int_to_ptr.vmem [resolvable:$true] %s16
      %22 = dma.hbm_to_vmem [thread:$0]  %s0, 128, %s17, [#allocation3], 64, 64, 4
    $region5: #{tpu_custom_call.1} parent=1 // pred_fallthru
      _
    // Predicated region
    $region6: #{tpu_custom_call.1} parent=1 // pred_check
      _
    $region7: #{tpu_custom_call.1} parent=1 // pred_check_branch
      %24 = sbr.rel (0) target = $region9
    $region8: #{tpu_custom_call.1} parent=1 // pred_region
      %s26 = ssub.s32 1024, 1024
      %27 = vsyncadd [#allocation6], %s26
      %s28 = sshll.u32 [#allocation5], 4
      %s29 = int_to_ptr.vmem [resolvable:$true] %s28
      %34 = dma.hbm_to_vmem [thread:$0]  %s1, 1024, %s29, [#allocation6], 64, 64, 4
    $region9: #{tpu_custom_call.1} parent=1 // pred_fallthru
      _
    // Predicated region
    $region10: #{tpu_custom_call.1} parent=1 // pred_check
      _
    $region11: #{tpu_custom_call.1} parent=1 // pred_check_branch
      %36 = sbr.rel (0) target = $region13
    $region12: #{tpu_custom_call.1} parent=1 // pred_region
      _
    $region13: #{tpu_custom_call.1} parent=1 // pred_fallthru
      _
    // Predicated region
    $region14: #{tpu_custom_call.1} parent=1 // pred_check
      _
    $region15: #{tpu_custom_call.1} parent=1 // pred_check_branch
      %38 = sbr.rel (0) target = $region17
    $region16: #{tpu_custom_call.1} parent=1 // pred_region
      %39 = dma.done [#allocation3], 128
    $region17: #{tpu_custom_call.1} parent=1 // pred_fallthru
      _
    // Predicated region
    $region18: #{tpu_custom_call.1} parent=1 // pred_check
      _
    $region19: #{tpu_custom_call.1} parent=1 // pred_check_branch
      %41 = sbr.rel (0) target = $region21
    $region20: #{tpu_custom_call.1} parent=1 // pred_region
      %42 = dma.done [#allocation6], 1024
    $region21: #{tpu_custom_call.1} parent=1 // pred_fallthru
      _
    %v44 = vld [vmem:[#allocation2] sm:$0xf]
    %v45 = vld [vmem:[#allocation2 + $0x4] sm:$0xf]
    %v46 = vld [vmem:[#allocation5] sm:$0xf]
    %v47 = vld [vmem:[#allocation5 + $0x4] sm:$0xf]
    %v48 = vld [vmem:[#allocation5 + $0x8] sm:$0xf]
    %v49 = vld [vmem:[#allocation5 + $0xc] sm:$0xf]
    %v50 = vld [vmem:[#allocation5 + $0x10] sm:$0xf]
    %v51 = vld [vmem:[#allocation5 + $0x14] sm:$0xf]
    %v52 = vld [vmem:[#allocation5 + $0x18] sm:$0xf]
    %v53 = vld [vmem:[#allocation5 + $0x1c] sm:$0xf]
    %v54 = vld [vmem:[#allocation5 + $0x20] sm:$0xf]
    %v55 = vld [vmem:[#allocation5 + $0x24] sm:$0xf]
    %v56 = vld [vmem:[#allocation5 + $0x28] sm:$0xf]
    %v57 = vld [vmem:[#allocation5 + $0x2c] sm:$0xf]
    %v58 = vld [vmem:[#allocation5 + $0x30] sm:$0xf]
    %v59 = vld [vmem:[#allocation5 + $0x34] sm:$0xf]
    %v60 = vld [vmem:[#allocation5 + $0x38] sm:$0xf]
    %v61 = vld [vmem:[#allocation5 + $0x3c] sm:$0xf]
    %v64 = vunpack.c.l.b16 %v44
    %v65 = vunpack.c.l.b16 %v45
    %v66 = vpack.c.b16 %v65, %v64
    %v84 = vunpack.c.l.b16 %v46
    %v85 = vunpack.c.l.b16 %v47
    %v86 = vunpack.c.l.b16 %v48
    %v87 = vunpack.c.l.b16 %v49
    %v88 = vunpack.c.l.b16 %v50
    %v89 = vunpack.c.l.b16 %v51
    %v90 = vunpack.c.l.b16 %v52
    %v91 = vunpack.c.l.b16 %v53
    %v92 = vunpack.c.l.b16 %v54
    %v93 = vunpack.c.l.b16 %v55
    %v94 = vunpack.c.l.b16 %v56
    %v95 = vunpack.c.l.b16 %v57
    %v96 = vunpack.c.l.b16 %v58
    %v97 = vunpack.c.l.b16 %v59
    %v98 = vunpack.c.l.b16 %v60
    %v99 = vunpack.c.l.b16 %v61
    %v100 = vpack.c.b16 %v85, %v84
    %v101 = vpack.c.b16 %v87, %v86
    %v102 = vpack.c.b16 %v89, %v88
    %v103 = vpack.c.b16 %v91, %v90
    %v104 = vpack.c.b16 %v93, %v92
    %v105 = vpack.c.b16 %v95, %v94
    %v106 = vpack.c.b16 %v97, %v96
    %v107 = vpack.c.b16 %v99, %v98
    %116 = vmatprep.subr.bf16.mxu0 0
    %117 = vmatpush1.bf16.msra.mxu0 %v100
    %118 = vmatprep.subr.bf16.mxu0 0
    %119 = vmatpush1.bf16.msra.mxu0 %v101
    %120 = vmatprep.subr.bf16.mxu0 0
    %121 = vmatpush1.bf16.msra.mxu0 %v102
    %122 = vmatprep.subr.bf16.mxu0 0
    %123 = vmatpush1.bf16.msra.mxu0 %v103
    %124 = vmatprep.subr.bf16.mxu0 0
    %125 = vmatpush1.bf16.msra.mxu0 %v104
    %126 = vmatprep.subr.bf16.mxu0 0
    %127 = vmatpush1.bf16.msra.mxu0 %v105
    %128 = vmatprep.subr.bf16.mxu0 0
    %129 = vmatpush1.bf16.msra.mxu0 %v106
    %130 = vmatprep.subr.bf16.mxu0 0
    %131 = vmatpush1.bf16.msra.mxu0 %v107
    %132 = vmatprep.subr.bf16.mxu0 0
    %133 = vmatpush1.bf16.msra.mxu0 0
    %134 = vmatprep.subr.bf16.mxu0 0
    %135 = vmatpush1.bf16.msra.mxu0 0
    %136 = vmatprep.subr.bf16.mxu0 0
    %137 = vmatpush1.bf16.msra.mxu0 0
    %138 = vmatprep.subr.bf16.mxu0 0
    %139 = vmatpush1.bf16.msra.mxu0 0
    %140 = vmatprep.subr.bf16.mxu0 0
    %141 = vmatpush1.bf16.msra.mxu0 0
    %142 = vmatprep.subr.bf16.mxu0 0
    %143 = vmatpush1.bf16.msra.mxu0 0
    %144 = vmatprep.subr.bf16.mxu0 0
    %145 = vmatpush1.bf16.msra.mxu0 0
    %146 = vmatprep.subr.bf16.mxu0 0
    %147 = vmatpush1.bf16.msra.mxu0 0
    %148 = vmatprep.mubr.bf16.mxu0 0
    %149 = vmatmul.mubr.bf16.gmra.mrb[0].mxu0 %v66
    %v150 = vpop.f32.mrb[0].mxu0
    %v151 = vadd.f32 0.0, %v150
    %v152 = vpop.f32.mrb[0].mxu0
    %v153 = vpop.f32.mrb[0].mxu0
    %v154 = vadd.f32 0.0, %v153
    %v155 = vpop.f32.mrb[0].mxu0
    %156 = vdwg.mxu0
    %p157 = scmp.eq.s32.totalorder 0, 0
    // Predicated region
    $region22: #{tpu_custom_call.1} parent=1 // pred_check
      %p158 = pneg %p157
    $region23: #{tpu_custom_call.1} parent=1 // pred_check_branch
      %160 = sbr.rel (%p158) target = $region25
    $region24: #{tpu_custom_call.1} parent=1 // pred_region
      %v161 = vld [vmem:[%s2] sm:$0x1]
      %v163 = vlaneseq
      %v164 = vshrl.u32 %v163, 7
      %v165 = vsub.s32 0, %v164
      %v166 = vrot.slane %v161, %v165
      %v168 = vadd.f32 %v151, %v166
      %v169 = vadd.f32 %v154, %v166
      %170 = vst [vmem:[#allocation7] sm:$0xff] %v168
      %171 = vst [vmem:[#allocation7 + $0x8] sm:$0xff] %v169
    $region25: #{tpu_custom_call.1} parent=1 // pred_fallthru
      _
    %p172 = scmp.gt.s32.totalorder 0, 0
    // Predicated region
    $region26: #{tpu_custom_call.1} parent=1 // pred_check
      %p173 = pneg %p172
    $region27: #{tpu_custom_call.1} parent=1 // pred_check_branch
      %175 = sbr.rel (%p173) target = $region29
    $region28: #{tpu_custom_call.1} parent=1 // pred_region
      %v176 = vld [vmem:[#allocation7] sm:$0xff]
      %v177 = vld [vmem:[#allocation7 + $0x8] sm:$0xff]
      %v178 = vadd.f32 %v176, %v151
      %v179 = vadd.f32 %v177, %v154
      %180 = vst [vmem:[#allocation7] sm:$0xff] %v178
      %181 = vst [vmem:[#allocation7 + $0x8] sm:$0xff] %v179
    $region29: #{tpu_custom_call.1} parent=1 // pred_fallthru
      _
    // Predicated region
    $region30: #{tpu_custom_call.1} parent=1 // pred_check
      _
    $region31: #{tpu_custom_call.1} parent=1 // pred_check_branch
      %183 = sbr.rel (0) target = $region33
    $region32: #{tpu_custom_call.1} parent=1 // pred_region
      %s185 = ssub.s32 256, 256
      %186 = vsyncadd [#allocation4], %s185
      %s187 = sshll.u32 [#allocation7], 4
      %s188 = int_to_ptr.vmem [resolvable:$true] %s187
      %193 = dma.vmem_to_hbm [thread:$0]  %s188, 256, %s3, [#allocation4], 128, 128, 8
    $region33: #{tpu_custom_call.1} parent=1 // pred_fallthru
      _
    // Predicated region
    $region34: #{tpu_custom_call.1} parent=1 // pred_check
      _
    $region35: #{tpu_custom_call.1} parent=1 // pred_check_branch
      %195 = sbr.rel (0) target = $region37
    $region36: #{tpu_custom_call.1} parent=1 // pred_region
      %196 = dma.done [#allocation4], 256
    $region37: #{tpu_custom_call.1} parent=1 // pred_fallthru
      _
    %197 = vsyncpa [#allocation3], 1
    %198 = vsyncpa [#allocation6], 1
    %199 = vsyncpa [#allocation4], 1

</llo_original>
